<compile_context>
chip_gen: v7x
topology: tpu7x:2x2x1
jax: 0.10.0
libtpu: 0.0.40
codegen_flags: <defaults>
</compile_context>

<pallas_src>
import functools

import jax
import jax.numpy as jnp
from jax.experimental import pallas as pl
from jax.experimental.pallas import tpu as pltpu  # noqa: F401  (TPU backend import)


def _identity_alias_kernel(w_hbm_ref, o_hbm_ref):
    # Output aliases the input buffer (input_output_aliases={0: 0}); the forward
    # pass is `return self.weight`, so nothing needs to be read or written.
    pass


@functools.partial(jax.jit, donate_argnums=(0,))
def synthesized_image_forward(weight: jax.Array) -> jax.Array:
    """Pallas implementation of SynthesizedImage.forward(): return self.weight.

    weight: (N, C, H, W) float32 parameter (the synthesized image).
    The parameter buffer is donated and aliased straight through to the output,
    so the op is effectively free (no copy kernel, no grid, no DMA).
    """
    return pl.pallas_call(
        _identity_alias_kernel,
        out_shape=jax.ShapeDtypeStruct(weight.shape, weight.dtype),
        in_specs=[pl.BlockSpec(memory_space=pl.ANY)],
        out_specs=pl.BlockSpec(memory_space=pl.ANY),
        input_output_aliases={0: 0},
    )(weight)


if __name__ == "__main__":
    # Deterministic parameter init, mirroring nn.Parameter(torch.rand(*img_shape)):
    # uniform [0, 1) values of shape img_shape.
    img_shape = (2, 4, 16, 16)
    key = jax.random.PRNGKey(0)
    weight = jax.random.uniform(key, img_shape, dtype=jnp.float32)

    # The forward donates/aliases `weight`'s buffer, so regenerate the expected
    # values from the same deterministic key for verification.
    expected = jax.random.uniform(key, img_shape, dtype=jnp.float32)

    out = jax.block_until_ready(synthesized_image_forward(weight))

    assert out.shape == img_shape
    assert out.dtype == jnp.float32
    assert bool(jnp.array_equal(out, expected))

    print("KERNEL_OK")
</pallas_src>

<mosaic_0001>
module attributes {stable_mosaic.version = 11 : i64} {
  func.func @_identity_alias_kernel(%arg0: memref<2x4x16x16xf32, #tpu.memory_space<any>>, %arg1: memref<2x4x16x16xf32, #tpu.memory_space<any>>) attributes {dimension_semantics = [], scalar_prefetch = 0 : i64, scratch_operands = 0 : i64, tpu.core_type = #tpu.core_type<tc>} {
    return
  }
}

</mosaic_0001>

<llo_original>
// kernel: synthesized_image_forward.1
$region0: #{synthesized_image_forward.1}
  #allocation0 [shape = 'u32[]', space=smem, size = 0x4, offset = 0x4, fixed_abs, tag = 'smem constant byte address 0x4 - core index']
  #allocation1 [shape = 'u32[144,128]{1,0:T(1,128)}', space=vmem, size = 0x12000, scoped, tag = 'internal scratch']
  %s0 = inlined_call_operand.hbm [shape: f32[2,4,16,16], index: 0, kind: input, shape index: {}, may-alias: {0,1}]
  %s1 = inlined_call_operand.hbm [shape: f32[2,4,16,16], index: 1, kind: output, shape index: {}, may-alias: {0,1}]
  %s2 = sld [smem:[#allocation0]]
  $region2: #{synthesized_image_forward.1} parent=0
    _
  %s4 = ssub.s32 1, %s2
  %s5 = scalar_select 0, %s4, %s2

</llo_original>
